<compile_context>
chip_gen: v7x
topology: tpu7x:2x2x1
jax: 0.10.0
libtpu: 0.0.40
codegen_flags: <defaults>
</compile_context>

<pallas_src>
import functools

import jax
import jax.numpy as jnp
from jax.experimental import pallas as pl
from jax.experimental.pallas import tpu as pltpu


def _embed_kernel(ids_ref, pos_ids_ref, tt_ids_ref,            # scalar-prefetch (SMEM, int32)
                  word_hbm, pos_tab_ref, type_tab_ref, w_ref,  # inputs
                  out_ref,                                     # output tile (tile_s, H)
                  word_rows, addend, sem,                      # scratch
                  *, tile_s, eps):
    base = pl.program_id(0) * tile_s

    # 1) Fire one row DMA per token in this tile. The word table lives in HBM, so only the
    #    O(tile_s * H) bytes actually needed are moved (gather, not one-hot @ table).
    def _issue(t, carry):
        row = ids_ref[base + t]
        pltpu.make_async_copy(word_hbm.at[row], word_rows.at[t], sem).start()
        return carry

    jax.lax.fori_loop(0, tile_s, _issue, 0)

    # 2) While the word-row DMAs are in flight, gather the tiny resident position / token-type
    #    tables with dynamic first-axis loads (no MXU K=2 / K=P padding waste).
    def _small(t, carry):
        p = pos_tab_ref[pos_ids_ref[base + t]].astype(jnp.float32)    # (H,)
        q = type_tab_ref[tt_ids_ref[base + t]].astype(jnp.float32)    # (H,)
        addend[t] = p + q
        return carry

    jax.lax.fori_loop(0, tile_s, _small, 0)

    # 3) Wait for all word-row DMAs. All copies share one semaphore and have identical size,
    #    so waiting once per issued copy with an equal-shaped descriptor is correct.
    def _wait(t, carry):
        pltpu.make_async_copy(word_hbm.at[0], word_rows.at[0], sem).wait()
        return carry

    jax.lax.fori_loop(0, tile_s, _wait, 0)

    # 4) Add + RMSNorm in f32; single lane-dense (tile_s, H) store. Dropout = identity (eval).
    x = word_rows[...].astype(jnp.float32) + addend[...]
    var = jnp.mean(x * x, axis=-1, keepdims=True)
    x = x * jax.lax.rsqrt(var + eps)
    x = w_ref[...] * x                       # (1, H) broadcasts over (tile_s, H)
    out_ref[...] = x.astype(out_ref.dtype)


def consyn_embeddings(input_ids, position_ids, token_type_ids,
                      word_table, pos_table, type_table, rms_weight,
                      *, eps=1e-12, tile_tokens=256, out_dtype=None):
    B, S = input_ids.shape
    V, H = word_table.shape
    P = pos_table.shape[0]
    T = type_table.shape[0]
    out_dtype = word_table.dtype if out_dtype is None else out_dtype

    # Flatten (B, S) into a token axis; clamp ids so the DMA gather can never read OOB HBM.
    N = B * S
    ids = jnp.clip(input_ids.reshape(N).astype(jnp.int32), 0, V - 1)
    pos = jnp.clip(position_ids.reshape(N).astype(jnp.int32), 0, P - 1)
    tt = jnp.clip(token_type_ids.reshape(N).astype(jnp.int32), 0, T - 1)

    # Lane/sublane-dense token tile; pad the token axis to a multiple of it (id 0 is valid).
    tile_s = tile_tokens if N >= tile_tokens else max(8, -(-N // 8) * 8)
    n_pad = -(-N // tile_s) * tile_s
    if n_pad != N:
        pad = n_pad - N
        ids = jnp.pad(ids, (0, pad))
        pos = jnp.pad(pos, (0, pad))
        tt = jnp.pad(tt, (0, pad))
    num_tiles = n_pad // tile_s

    w2 = rms_weight.astype(jnp.float32).reshape(1, H)

    kernel = functools.partial(_embed_kernel, tile_s=tile_s, eps=float(eps))

    out = pl.pallas_call(
        kernel,
        out_shape=jax.ShapeDtypeStruct((n_pad, H), out_dtype),
        grid_spec=pltpu.PrefetchScalarGridSpec(
            num_scalar_prefetch=3,                               # ids / pos / tt -> SMEM
            grid=(num_tiles,),
            in_specs=[
                pl.BlockSpec(memory_space=pl.ANY),               # word table stays in HBM
                pl.BlockSpec((P, H), lambda i, *_: (0, 0)),      # position table (small, resident)
                pl.BlockSpec((T, H), lambda i, *_: (0, 0)),      # token-type table (small, resident)
                pl.BlockSpec((1, H), lambda i, *_: (0, 0)),      # RMSNorm weight
            ],
            out_specs=pl.BlockSpec((tile_s, H), lambda i, *_: (i, 0)),
            scratch_shapes=[
                pltpu.VMEM((tile_s, H), word_table.dtype),       # gathered word rows
                pltpu.VMEM((tile_s, H), jnp.float32),            # pos + type addend
                pltpu.SemaphoreType.DMA(()),                     # shared DMA-completion sem
            ],
        ),
        compiler_params=pltpu.CompilerParams(
            dimension_semantics=("parallel",),
            vmem_limit_bytes=32 * 1024 * 1024,                   # explicit budget (v7x: 64 MiB phys)
        ),
    )(ids, pos, tt, word_table, pos_table, type_table, w2)

    return out[:N].reshape(B, S, H)


def _reference(input_ids, position_ids, token_type_ids,
               word_table, pos_table, type_table, rms_weight, eps):
    x = (word_table[input_ids]
         + pos_table[position_ids]
         + type_table[token_type_ids])
    var = jnp.mean(x * x, axis=-1, keepdims=True)
    x = x * jax.lax.rsqrt(var + eps)
    return rms_weight * x


if __name__ == "__main__":
    # Small synthetic config (ConsynConfig-like):
    #   vocab_size=256, hidden_size=128, max_position_embeddings=16,
    #   type_vocab_size=2, pad_token_id=0, use_rms_norm=True,
    #   layer_norm_eps=1e-12, hidden_dropout_prob=0.0 (eval -> identity)
    B, S = 2, 8
    V, H, P, T = 256, 128, 16, 2
    EPS = 1e-12
    PAD = 0

    key = jax.random.PRNGKey(0)
    k_word, k_pos, k_type, k_ids, k_tt = jax.random.split(key, 5)

    word_table = 0.02 * jax.random.normal(k_word, (V, H), jnp.float32)
    word_table = word_table.at[PAD].set(0.0)   # padding_idx row initialized to zero
    pos_table = 0.02 * jax.random.normal(k_pos, (P, H), jnp.float32)
    type_table = 0.02 * jax.random.normal(k_type, (T, H), jnp.float32)
    rms_weight = jnp.ones((H,), jnp.float32)   # RMSNorm init: ones

    input_ids = jax.random.randint(k_ids, (B, S), 0, V, dtype=jnp.int32)
    position_ids = jnp.broadcast_to(jnp.arange(S, dtype=jnp.int32)[None, :], (B, S))
    token_type_ids = jax.random.randint(k_tt, (B, S), 0, T, dtype=jnp.int32)

    out = consyn_embeddings(input_ids, position_ids, token_type_ids,
                            word_table, pos_table, type_table, rms_weight,
                            eps=EPS)
    out = jax.block_until_ready(out)

    ref = _reference(input_ids, position_ids, token_type_ids,
                     word_table, pos_table, type_table, rms_weight, EPS)
    assert out.shape == (B, S, H)
    assert jnp.allclose(out, ref, rtol=1e-5, atol=1e-5), "mismatch vs. reference"

    print("KERNEL_OK")
</pallas_src>

<mosaic_0001>
module attributes {stable_mosaic.version = 11 : i64} {
  func.func @_embed_kernel(%arg0: i32, %arg1: memref<16xi32, #tpu.memory_space<smem>>, %arg2: memref<16xi32, #tpu.memory_space<smem>>, %arg3: memref<16xi32, #tpu.memory_space<smem>>, %arg4: memref<256x128xf32, #tpu.memory_space<any>>, %arg5: memref<16x128xf32, #tpu.memory_space<vmem>>, %arg6: memref<2x128xf32, #tpu.memory_space<vmem>>, %arg7: memref<1x128xf32, #tpu.memory_space<vmem>>, %arg8: memref<16x128xf32, #tpu.memory_space<vmem>>, %arg9: memref<16x128xf32, #tpu.memory_space<vmem>>, %arg10: memref<16x128xf32, #tpu.memory_space<vmem>>, %arg11: memref<!tpu.dma_semaphore, #tpu.memory_space<semaphore_mem>>) attributes {dimension_semantics = [#tpu.dimension_semantics<parallel>], iteration_bounds = array<i64: 1>, scalar_prefetch = 3 : i64, scratch_operands = 3 : i64, tpu.core_type = #tpu.core_type<tc>, window_params = [{}, {pipeline_mode = #tpu.pipeline_mode<synchronous>, transform_indices = @transform_1, window_bounds = array<i64: 16, 128>}, {pipeline_mode = #tpu.pipeline_mode<synchronous>, transform_indices = @transform_2, window_bounds = array<i64: 2, 128>}, {pipeline_mode = #tpu.pipeline_mode<synchronous>, transform_indices = @transform_3, window_bounds = array<i64: 1, 128>}, {transform_indices = @transform_4, window_bounds = array<i64: 16, 128>}]} {
    %c16_i32 = arith.constant 16 : i32
    %0 = arith.muli %arg0, %c16_i32 : i32
    %c0_i32 = arith.constant 0 : i32
    %c16_i32_0 = arith.constant 16 : i32
    %1 = arith.addi %c0_i32, %c16_i32_0 : i32
    %c1_i32 = arith.constant 1 : i32
    scf.for %arg12 = %c0_i32 to %1 step %c1_i32  : i32 {
      %21 = arith.addi %0, %arg12 : i32
      %22 = arith.index_cast %21 : i32 to index
      %23 = memref.load %arg1[%22] : memref<16xi32, #tpu.memory_space<smem>>
      %c0_i32_18 = arith.constant 0 : i32
      %24 = tpu.memref_slice %arg4[%23, %c0_i32_18] : memref<256x128xf32, #tpu.memory_space<any>> -> memref<1x128xf32, #tpu.memory_space<any>>
      %25 = tpu.memref_squeeze %24 : memref<1x128xf32, #tpu.memory_space<any>> -> memref<128xf32, #tpu.memory_space<any>>
      %c0_i32_19 = arith.constant 0 : i32
      %26 = tpu.memref_slice %arg9[%arg12, %c0_i32_19] : memref<16x128xf32, #tpu.memory_space<vmem>> -> memref<1x128xf32, #tpu.memory_space<vmem>>
      %27 = tpu.memref_squeeze %26 : memref<1x128xf32, #tpu.memory_space<vmem>> -> memref<128xf32, #tpu.memory_space<vmem>>
      tpu.enqueue_dma source(%25 : memref<128xf32, #tpu.memory_space<any>>) target(%27 : memref<128xf32, #tpu.memory_space<vmem>>) target_semaphore(%arg11 : memref<!tpu.dma_semaphore, #tpu.memory_space<semaphore_mem>>)
    }
    %c16_i32_1 = arith.constant 16 : i32
    %c0_i32_2 = arith.constant 0 : i32
    %c16_i32_3 = arith.constant 16 : i32
    %2 = arith.addi %c0_i32_2, %c16_i32_3 : i32
    %c1_i32_4 = arith.constant 1 : i32
    scf.for %arg12 = %c0_i32_2 to %2 step %c1_i32_4  : i32 {
      %21 = arith.addi %0, %arg12 : i32
      %22 = arith.index_cast %21 : i32 to index
      %23 = memref.load %arg2[%22] : memref<16xi32, #tpu.memory_space<smem>>
      %24 = arith.index_cast %23 : i32 to index
      %c0_18 = arith.constant 0 : index
      %25 = vector.load %arg5[%24, %c0_18] : memref<16x128xf32, #tpu.memory_space<vmem>>, vector<1x128xf32>
      %26 = vector.shape_cast %25 : vector<1x128xf32> to vector<128xf32>
      %27 = arith.addi %0, %arg12 : i32
      %28 = arith.index_cast %27 : i32 to index
      %29 = memref.load %arg3[%28] : memref<16xi32, #tpu.memory_space<smem>>
      %30 = arith.index_cast %29 : i32 to index
      %c0_19 = arith.constant 0 : index
      %31 = vector.load %arg6[%30, %c0_19] : memref<2x128xf32, #tpu.memory_space<vmem>>, vector<1x128xf32>
      %32 = vector.shape_cast %31 : vector<1x128xf32> to vector<128xf32>
      %33 = arith.addf %26, %32 : vector<128xf32>
      %34 = arith.index_cast %arg12 : i32 to index
      %c0_20 = arith.constant 0 : index
      %35 = vector.load %arg10[%34, %c0_20] : memref<16x128xf32, #tpu.memory_space<vmem>>, vector<1x128xf32>
      %36 = vector.shape_cast %35 : vector<1x128xf32> to vector<128xf32>
      %37 = vector.shape_cast %33 : vector<128xf32> to vector<1x128xf32>
      tpu.vector_store %arg10[%34, %c0_20], %37 {strides = array<i32>} : memref<16x128xf32, #tpu.memory_space<vmem>>, vector<1x128xf32>,
    }
    %c16_i32_5 = arith.constant 16 : i32
    %c0_i32_6 = arith.constant 0 : i32
    %c16_i32_7 = arith.constant 16 : i32
    %3 = arith.addi %c0_i32_6, %c16_i32_7 : i32
    %c1_i32_8 = arith.constant 1 : i32
    scf.for %arg12 = %c0_i32_6 to %3 step %c1_i32_8  : i32 {
      %c0_i32_18 = arith.constant 0 : i32
      %c0_i32_19 = arith.constant 0 : i32
      %c0_i32_20 = arith.constant 0 : i32
      %21 = tpu.memref_slice %arg4[%c0_i32_18, %c0_i32_20] : memref<256x128xf32, #tpu.memory_space<any>> -> memref<1x128xf32, #tpu.memory_space<any>>
      %22 = tpu.memref_squeeze %21 : memref<1x128xf32, #tpu.memory_space<any>> -> memref<128xf32, #tpu.memory_space<any>>
      %c0_i32_21 = arith.constant 0 : i32
      %23 = tpu.memref_slice %arg9[%c0_i32_19, %c0_i32_21] : memref<16x128xf32, #tpu.memory_space<vmem>> -> memref<1x128xf32, #tpu.memory_space<vmem>>
      %24 = tpu.memref_squeeze %23 : memref<1x128xf32, #tpu.memory_space<vmem>> -> memref<128xf32, #tpu.memory_space<vmem>>
      tpu.wait_dma2 semaphore(%arg11 : memref<!tpu.dma_semaphore, #tpu.memory_space<semaphore_mem>>) src(%22 : memref<128xf32, #tpu.memory_space<any>>) dst(%24 : memref<128xf32, #tpu.memory_space<vmem>>)
    }
    %c0 = arith.constant 0 : index
    %c0_9 = arith.constant 0 : index
    %4 = vector.load %arg9[%c0, %c0_9] : memref<16x128xf32, #tpu.memory_space<vmem>>, vector<16x128xf32>
    %c0_10 = arith.constant 0 : index
    %c0_11 = arith.constant 0 : index
    %5 = vector.load %arg10[%c0_10, %c0_11] : memref<16x128xf32, #tpu.memory_space<vmem>>, vector<16x128xf32>
    %6 = arith.addf %4, %5 : vector<16x128xf32>
    %7 = arith.mulf %6, %6 : vector<16x128xf32>
    %cst = arith.constant dense<0.000000e+00> : vector<16xf32>
    %8 = vector.multi_reduction <add>, %7, %cst [1] : vector<16x128xf32> to vector<16xf32>
    %9 = vector.shape_cast %8 : vector<16xf32> to vector<16x1xf32>
    %cst_12 = arith.constant 1.280000e+02 : f32
    %10 = vector.broadcast %cst_12 : f32 to vector<16x1xf32>
    %11 = arith.divf %9, %10 : vector<16x1xf32>
    %cst_13 = arith.constant 9.99999996E-13 : f32
    %12 = vector.broadcast %cst_13 : f32 to vector<16x1xf32>
    %13 = arith.addf %11, %12 : vector<16x1xf32>
    %14 = math.rsqrt %13 : vector<16x1xf32>
    %15 = vector.broadcast %14 : vector<16x1xf32> to vector<16x128xf32>
    %16 = arith.mulf %6, %15 : vector<16x128xf32>
    %c0_14 = arith.constant 0 : index
    %c0_15 = arith.constant 0 : index
    %17 = vector.load %arg7[%c0_14, %c0_15] : memref<1x128xf32, #tpu.memory_space<vmem>>, vector<1x128xf32>
    %18 = vector.broadcast %17 : vector<1x128xf32> to vector<16x128xf32>
    %19 = arith.mulf %18, %16 : vector<16x128xf32>
    %c0_16 = arith.constant 0 : index
    %c0_17 = arith.constant 0 : index
    %20 = vector.load %arg8[%c0_16, %c0_17] : memref<16x128xf32, #tpu.memory_space<vmem>>, vector<16x128xf32>
    tpu.vector_store %arg8[%c0_16, %c0_17], %19 {strides = array<i32>} : memref<16x128xf32, #tpu.memory_space<vmem>>, vector<16x128xf32>,
    return
  }
  func.func @transform_1(%arg0: i32, %arg1: memref<16xi32, #tpu.memory_space<smem>>, %arg2: memref<16xi32, #tpu.memory_space<smem>>, %arg3: memref<16xi32, #tpu.memory_space<smem>>) -> (i32, i32) {
    %c0_i32 = arith.constant 0 : i32
    %c0_i32_0 = arith.constant 0 : i32
    %c0_i32_1 = arith.constant 0 : i32
    return %c0_i32, %c0_i32_0 : i32, i32
  }
  func.func @transform_2(%arg0: i32, %arg1: memref<16xi32, #tpu.memory_space<smem>>, %arg2: memref<16xi32, #tpu.memory_space<smem>>, %arg3: memref<16xi32, #tpu.memory_space<smem>>) -> (i32, i32) {
    %c0_i32 = arith.constant 0 : i32
    %c0_i32_0 = arith.constant 0 : i32
    %c0_i32_1 = arith.constant 0 : i32
    return %c0_i32, %c0_i32_0 : i32, i32
  }
  func.func @transform_3(%arg0: i32, %arg1: memref<16xi32, #tpu.memory_space<smem>>, %arg2: memref<16xi32, #tpu.memory_space<smem>>, %arg3: memref<16xi32, #tpu.memory_space<smem>>) -> (i32, i32) {
    %c0_i32 = arith.constant 0 : i32
    %c0_i32_0 = arith.constant 0 : i32
    %c0_i32_1 = arith.constant 0 : i32
    return %c0_i32, %c0_i32_0 : i32, i32
  }
  func.func @transform_4(%arg0: i32, %arg1: memref<16xi32, #tpu.memory_space<smem>>, %arg2: memref<16xi32, #tpu.memory_space<smem>>, %arg3: memref<16xi32, #tpu.memory_space<smem>>) -> (i32, i32) {
    %c0_i32 = arith.constant 0 : i32
    %c0_i32_0 = arith.constant 0 : i32
    return %arg0, %c0_i32 : i32, i32
  }
}

</mosaic_0001>

<llo_original>
// kernel: tpu_custom_call.1
$region0: #{tpu_custom_call.1}
  #allocation0 [shape = 'u32[]', space=smem, size = 0x4, offset = 0x4, fixed_abs, tag = 'smem constant byte address 0x4 - core index']
  #allocation1 [shape = 'u32[144,128]{1,0:T(1,128)}', space=vmem, size = 0x12000, scoped, tag = 'internal scratch']
  #allocation2 [shape = 'f32[16,128]{1,0:T(8,128)}', space=vmem, size = 0x2000, scoped, tag = 'scratch operand']
  #allocation3 [shape = 'f32[16,128]{1,0:T(8,128)}', space=vmem, size = 0x2000, scoped, tag = 'scratch operand']
  #allocation4 [shape = 's32[1]{0}', space=sflag, size = 0x4, scoped, tag = 'scratch operand']
  #allocation5 [shape = 's32[1]{0}', space=sflag, size = 0x4, scoped, tag = 'scoped memory for tpu_custom_call.1']
  #allocation6 [shape = 'u8[512]{0}', space=smem, size = 0x200, scoped, tag = 'prefetched SMEM operand 0']
  #allocation7 [shape = 'u8[512]{0}', space=smem, size = 0x200, scoped, tag = 'prefetched SMEM operand 1']
  #allocation8 [shape = 'u8[512]{0}', space=smem, size = 0x200, scoped, tag = 'prefetched SMEM operand 2']
  #allocation13 [shape = 's32[]', space=sflag, size = 0x4, offset = 0, fixed_abs, tag = 'sflag constant byte address 0x0 - dummy sync flag']
  #allocation14 [shape = 's32[]', space=sflag, size = 0x4, offset = 0, fixed_abs, tag = 'sflag constant byte address 0x0 - dummy sync flag']
  #allocation15 [shape = 'u32[]', space=smem, size = 0x4, offset = 0x44, fixed_abs, tag = 'smem constant byte address 0x44 - assertion arg 0']
  #allocation16 [shape = 'u32[]', space=smem, size = 0x4, offset = 0x48, fixed_abs, tag = 'smem constant byte address 0x48 - assertion arg 1']
  %s0 = inlined_call_operand.hbm [shape: s32[16], index: 0, kind: input, shape index: {}]
  %s1 = inlined_call_operand.vmem [shape: s32[16], index: 1, kind: input, shape index: {}]
  %s2 = inlined_call_operand.vmem [shape: s32[16], index: 2, kind: input, shape index: {}]
  %s3 = inlined_call_operand.hbm [shape: f32[256,128], index: 3, kind: input, shape index: {}]
  %s4 = inlined_call_operand.hbm [shape: f32[16,128], index: 4, kind: input, shape index: {}]
  %s5 = inlined_call_operand.vmem [shape: f32[2,128], index: 5, kind: input, shape index: {}]
  %s6 = inlined_call_operand.vmem [shape: f32[1,128], index: 6, kind: input, shape index: {}]
  %s7 = inlined_call_operand.hbm [shape: f32[16,128], index: 7, kind: output, shape index: {}]
  %s8 = sld [smem:[#allocation0]]
  $region51: #{tpu_custom_call.1} parent=0
    _
  %s10 = ssub.s32 1, %s8
  %s11 = scalar_select 0, %s10, %s8
  %13 = dma.hbm_to_smem %s0, 16, [#allocation6], [#allocation5]
  %s14 = sshll.u32 %s1, 4
  %s15 = int_to_ptr.vmem [resolvable:$true] %s14
  %17 = dma.vmem_to_smem %s15, 16, [#allocation7], [#allocation5]
  %s18 = sshll.u32 %s2, 4
  %s19 = int_to_ptr.vmem [resolvable:$true] %s18
  %21 = dma.vmem_to_smem %s19, 16, [#allocation8], [#allocation5]
  %22 = dma.done [#allocation5], 48
  %23 = sfence
  $region1: #{tpu_custom_call.1} parent=0
    #allocation9 [shape = 'u8[8192]{0}', space=vmem, size = 0x2000, scoped, tag = 'input window, operand 4, single buffered']
    #allocation10 [shape = 's32[1]{0}', space=sflag, size = 0x4, scoped, tag = 'scoped memory for tpu_custom_call.1']
    #allocation11 [shape = 's32[1]{0}', space=sflag, size = 0x4, scoped, tag = 'scoped memory for tpu_custom_call.1']
    #allocation12 [shape = 'u8[8192]{0}', space=vmem, size = 0x2000, scoped, tag = 'output window, operand 0, single buffered']
    %24 = vsyncpa [#allocation10], 0
    %25 = vsyncpa [#allocation11], 0
    // Predicated region
    $region2: #{tpu_custom_call.1} parent=1 // pred_check
      _
    $region3: #{tpu_custom_call.1} parent=1 // pred_check_branch
      %27 = sbr.rel (0) target = $region5
    $region4: #{tpu_custom_call.1} parent=1 // pred_region
      %s29 = ssub.s32 256, 256
      %30 = vsyncadd [#allocation10], %s29
      %s31 = sshll.u32 [#allocation9], 4
      %s32 = int_to_ptr.vmem [resolvable:$true] %s31
      %37 = dma.hbm_to_vmem [thread:$0]  %s4, 256, %s32, [#allocation10], 128, 128, 8
    $region5: #{tpu_custom_call.1} parent=1 // pred_fallthru
      _
    // Predicated region
    $region6: #{tpu_custom_call.1} parent=1 // pred_check
      _
    $region7: #{tpu_custom_call.1} parent=1 // pred_check_branch
      %39 = sbr.rel (0) target = $region9
    $region8: #{tpu_custom_call.1} parent=1 // pred_region
      _
    $region9: #{tpu_custom_call.1} parent=1 // pred_fallthru
      _
    // Predicated region
    $region10: #{tpu_custom_call.1} parent=1 // pred_check
      _
    $region11: #{tpu_custom_call.1} parent=1 // pred_check_branch
      %41 = sbr.rel (0) target = $region13
    $region12: #{tpu_custom_call.1} parent=1 // pred_region
      _
    $region13: #{tpu_custom_call.1} parent=1 // pred_fallthru
      _
    // Predicated region
    $region14: #{tpu_custom_call.1} parent=1 // pred_check
      _
    $region15: #{tpu_custom_call.1} parent=1 // pred_check_branch
      %43 = sbr.rel (0) target = $region17
    $region16: #{tpu_custom_call.1} parent=1 // pred_region
      %44 = dma.done [#allocation10], 256
    $region17: #{tpu_custom_call.1} parent=1 // pred_fallthru
      _
    %s45 = smul.u32 0, 16
    loop: start=0, step=1, limit=16
    $region18: #{tpu_custom_call.1} parent=1 // loop_pre_header
      _
    $region19: #{tpu_custom_call.1} parent=1 // loop_header
      %s47 = sphi 0, %s51
      %p48 = scmp.ge.s32.totalorder %s47, 16
    $region20: #{tpu_custom_call.1} parent=1 // loop_header_branch
      %50 = sbr.rel (%p48) target = $region24
    $region21: #{tpu_custom_call.1} parent=1 // loop_body
      %s52 = sadd.s32 %s45, %s47
      %s53 = sld [smem:[#allocation6 + %s52]]
      %s54 = smul.addr %s53, 16
      %s55 = scalar_lea.hbm %s3, %s54
      %s56 = scalar_lea.vmem [#allocation2], %s47
      // Predicated region
      $region25: #{tpu_custom_call.1} parent=21 // pred_check
        _
      $region26: #{tpu_custom_call.1} parent=21 // pred_check_branch
        %58 = sbr.rel target = $region28
      $region27: #{tpu_custom_call.1} parent=21 // pred_region
        %59 = sst [smem:[#allocation15]] [#allocation14]
        %60 = sst [smem:[#allocation16]] [#allocation13]
      $region28: #{tpu_custom_call.1} parent=21 // pred_fallthru
        _
      %62 = shalt.err (0)
      %s64 = sshll.u32 %s56, 4
      %s65 = int_to_ptr.vmem [resolvable:$true] %s64
      %67 = dma.hbm_to_vmem [thread:$0]  %s55, 16, %s65, [#allocation4]
    $region22: #{tpu_custom_call.1} parent=1 // loop_footer
      %s51 = sadd.s32 1, %s47
    $region23: #{tpu_custom_call.1} parent=1 // loop_footer_branch
      %46 = sbr.rel target = $region19
    $region24: #{tpu_custom_call.1} parent=1 // loop_exit
      _
    loop: start=0, step=1, limit=16
    $region29: #{tpu_custom_call.1} parent=1 // loop_pre_header
      _
    $region30: #{tpu_custom_call.1} parent=1 // loop_header
      %s69 = sphi 0, %s73
      %p70 = scmp.ge.s32.totalorder %s69, 16
    $region31: #{tpu_custom_call.1} parent=1 // loop_header_branch
      %72 = sbr.rel (%p70) target = $region35
    $region32: #{tpu_custom_call.1} parent=1 // loop_body
      %s74 = sadd.s32 %s45, %s69
      %s75 = sld [smem:[#allocation7 + %s74]]
      %s76 = scalar_lea.vmem [#allocation9], %s75
      %v77 = vld [vmem:[%s76] sm:$0x1]
      %s78 = sld [smem:[#allocation8 + %s74]]
      %s79 = scalar_lea.vmem %s5, %s78
      %v80 = vld [vmem:[%s79] sm:$0x1]
      %v81 = vadd.f32 %v77, %v80
      %s82 = scalar_lea.vmem [#allocation3], %s69
      %83 = vst [vmem:[%s82] sm:$0x1] %v81
    $region33: #{tpu_custom_call.1} parent=1 // loop_footer
      %s73 = sadd.s32 1, %s69
    $region34: #{tpu_custom_call.1} parent=1 // loop_footer_branch
      %68 = sbr.rel target = $region30
    $region35: #{tpu_custom_call.1} parent=1 // loop_exit
      _
    loop: start=0, step=1, limit=16
    $region36: #{tpu_custom_call.1} parent=1 // loop_pre_header
      _
    $region37: #{tpu_custom_call.1} parent=1 // loop_header
      %s85 = sphi 0, %s89
      %p86 = scmp.ge.s32.totalorder %s85, 16
    $region38: #{tpu_custom_call.1} parent=1 // loop_header_branch
      %88 = sbr.rel (%p86) target = $region42
    $region39: #{tpu_custom_call.1} parent=1 // loop_body
      %91 = dma.done [#allocation4], 16
    $region40: #{tpu_custom_call.1} parent=1 // loop_footer
      %s89 = sadd.s32 1, %s85
    $region41: #{tpu_custom_call.1} parent=1 // loop_footer_branch
      %84 = sbr.rel target = $region37
    $region42: #{tpu_custom_call.1} parent=1 // loop_exit
      _
    %v92 = vld [vmem:[#allocation2] sm:$0xff]
    %v93 = vld [vmem:[#allocation2 + $0x8] sm:$0xff]
    %v94 = vld [vmem:[#allocation3] sm:$0xff]
    %v95 = vld [vmem:[#allocation3 + $0x8] sm:$0xff]
    %v96 = vadd.f32 %v92, %v94
    %v97 = vadd.f32 %v93, %v95
    %v98 = vmul.f32 %v96, %v96
    %v99 = vmul.f32 %v97, %v97
    %100 = vadd.xlane.f32.xlu0 %v98
    %v101 = vpop.xlane.xlu0 %100
    %102 = vadd.xlane.f32.xlu0 %v99
    %v103 = vpop.xlane.xlu0 %102
    %v104 = vrcp.pop 128.0
    %v105 = vmul.f32 %v101, %v104
    %v106 = vmul.f32 %v103, %v104
    %v107 = vadd.f32 %v105, 1e-12
    %v108 = vadd.f32 %v106, 1e-12
    %v109 = vrsqrt.pop %v107
    %v110 = vrsqrt.pop %v108
    %v111 = vmul.f32 %v96, %v109
    %v112 = vmul.f32 %v97, %v110
    %v113 = vld [vmem:[%s6] sm:$0x1]
    %v115 = vlaneseq
    %v116 = vshrl.u32 %v115, 7
    %v117 = vsub.s32 0, %v116
    %v118 = vrot.slane %v113, %v117
    %v120 = vmul.f32 %v118, %v111
    %v121 = vmul.f32 %v118, %v112
    %122 = vst [vmem:[#allocation12] sm:$0xff] %v120
    %123 = vst [vmem:[#allocation12 + $0x8] sm:$0xff] %v121
    // Predicated region
    $region43: #{tpu_custom_call.1} parent=1 // pred_check
      _
    $region44: #{tpu_custom_call.1} parent=1 // pred_check_branch
      %125 = sbr.rel (0) target = $region46
    $region45: #{tpu_custom_call.1} parent=1 // pred_region
      %s127 = ssub.s32 256, 256
      %128 = vsyncadd [#allocation11], %s127
      %s129 = sshll.u32 [#allocation12], 4
      %s130 = int_to_ptr.vmem [resolvable:$true] %s129
      %135 = dma.vmem_to_hbm [thread:$0]  %s130, 256, %s7, [#allocation11], 128, 128, 8
    $region46: #{tpu_custom_call.1} parent=1 // pred_fallthru
      _
    // Predicated region
    $region47: #{tpu_custom_call.1} parent=1 // pred_check
      _
    $region48: #{tpu_custom_call.1} parent=1 // pred_check_branch
      %137 = sbr.rel (0) target = $region50
    $region49: #{tpu_custom_call.1} parent=1 // pred_region
      %138 = dma.done [#allocation11], 256
    $region50: #{tpu_custom_call.1} parent=1 // pred_fallthru
      _
    %139 = vsyncpa [#allocation10], 1
    %140 = vsyncpa [#allocation11], 1
  %141 = vsyncmov [#allocation4]
  %s142 = vpop.sfrf %141
  %p143 = scmp.eq.s32.totalorder %s142, 0
  %p144 = pneg %p143
  %146 = shalt.err (%p144)

</llo_original>
